<compile_context>
chip_gen: v5e
topology: v5e:2x2
jax: 0.10.0
libtpu: 0.0.40
codegen_flags: <defaults>
</compile_context>

<pallas_src>
import functools

import jax
import jax.numpy as jnp
from jax.experimental import pallas as pl
from jax.experimental.pallas import tpu as pltpu  # noqa: F401  (TPU backend)


def _bn_conv_kernel(x_ref, w_ref, g_ref, b_ref, mask_ref, o_ref,
                    *, K, C_in, d, m_valid, eps):
    # x_ref    : (C_in, L)        flattened padded input, L = M + (K-1)*d
    # w_ref    : (C_out, K*C_in)  fused conv weights (tap-major columns)
    # g_ref    : (C_out, 1)       BN gamma
    # b_ref    : (C_out, 1)       BN beta
    # mask_ref : (1, M)           1.0 on real conv-output columns, 0.0 on row-tail padding
    # o_ref    : (C_out, M)
    C_out, M = o_ref.shape

    # Convolution: K dilated width-windows, each a static lane-offset slice of the flat
    # input; one small MXU matmul per tap accumulating into a ~7-vreg (C_out, M) acc.
    acc = jnp.zeros((C_out, M), jnp.float32)
    for k in range(K):  # static unroll over kernel taps
        w_k = w_ref[:, k * C_in:(k + 1) * C_in]          # (C_out, C_in)
        x_k = x_ref[:, k * d:k * d + M]                  # (C_in, M) shifted window
        acc = acc + jnp.dot(w_k, x_k, preferred_element_type=jnp.float32)

    # BatchNorm2d, training mode: batch statistics over the m_valid real output columns
    # (= N*H_out*W_out), biased variance, folded into per-channel scale/shift.
    mask = mask_ref[...]
    inv_n = 1.0 / m_valid
    mean = jnp.sum(acc * mask, axis=1, keepdims=True) * inv_n        # (C_out, 1)
    diff = (acc - mean) * mask
    var = jnp.sum(diff * diff, axis=1, keepdims=True) * inv_n        # (C_out, 1)
    scale = g_ref[...] * jax.lax.rsqrt(var + eps)                    # (C_out, 1)
    shift = b_ref[...] - mean * scale                                # (C_out, 1)
    o_ref[...] = (acc * scale + shift).astype(o_ref.dtype)


def creat_bn_conv_forward(x_nchw, conv_w, conv_b, bn_gamma, bn_beta,
                          *, padding, dilation, eps=1e-5):
    """x_nchw: (N, C_in, H, W); conv_w: (C_out, C_in, 1, K). Returns NCHW float32."""
    del conv_b  # exactly cancelled by training-mode BN's mean subtraction
    N, C_in, H, W = x_nchw.shape
    C_out, _, _, K = conv_w.shape
    p, d = padding, dilation
    H_out = H + 2 * p                       # 1xK kernel -> every padded row is an output row
    W_pad = W + 2 * p
    W_out = W_pad - d * (K - 1)
    M_cols = N * H_out * W_pad              # columns carried through the kernel
    M_valid = N * H_out * W_out             # real conv outputs == BN reduction count
    L = M_cols + (K - 1) * d                # tail so the last tap's window stays in bounds

    # Glue: NCHW -> (C_in, N, H_pad, W_pad) -> flat (C_in, L). One copy of the input.
    x = jnp.transpose(x_nchw, (1, 0, 2, 3)).astype(jnp.float32)
    x = jnp.pad(x, ((0, 0), (0, 0), (p, p), (p, p)))
    x = x.reshape(C_in, M_cols)
    x = jnp.pad(x, ((0, 0), (0, L - M_cols)))

    # Fused (C_out, K*C_in) weights, tap-major columns matching the kernel's slices.
    w = jnp.transpose(conv_w[:, :, 0, :], (0, 2, 1)).reshape(C_out, K * C_in)
    w = w.astype(jnp.float32)
    g = bn_gamma.reshape(C_out, 1).astype(jnp.float32)
    b = bn_beta.reshape(C_out, 1).astype(jnp.float32)

    # Validity mask over flattened (n, h, w_padded) columns: real outputs have w < W_out.
    col_in_row = jnp.arange(M_cols, dtype=jnp.int32) % W_pad
    mask = (col_in_row < W_out).astype(jnp.float32).reshape(1, M_cols)

    kernel = functools.partial(_bn_conv_kernel, K=K, C_in=C_in, d=d,
                               m_valid=float(M_valid), eps=eps)
    out_flat = pl.pallas_call(
        kernel,
        out_shape=jax.ShapeDtypeStruct((C_out, M_cols), jnp.float32),
        grid=(1,),  # whole problem is one small VMEM-resident block at these shapes
        in_specs=[
            pl.BlockSpec((C_in, L), lambda i: (0, 0)),
            pl.BlockSpec((C_out, K * C_in), lambda i: (0, 0)),
            pl.BlockSpec((C_out, 1), lambda i: (0, 0)),
            pl.BlockSpec((C_out, 1), lambda i: (0, 0)),
            pl.BlockSpec((1, M_cols), lambda i: (0, 0)),
        ],
        out_specs=pl.BlockSpec((C_out, M_cols), lambda i: (0, 0)),
    )(x, w, g, b, mask)

    # (C_out, N, H_out, W_pad) -> drop each row's padded tail -> NCHW
    out = out_flat.reshape(C_out, N, H_out, W_pad)[:, :, :, :W_out]
    return jnp.transpose(out, (1, 0, 2, 3))


def _reference(x_nchw, conv_w, conv_b, gamma, beta, *, padding, dilation, eps=1e-5):
    # Pure-JAX reference of the PyTorch forward (conv2d + training-mode BN).
    y = jax.lax.conv_general_dilated(
        x_nchw.astype(jnp.float32), conv_w.astype(jnp.float32),
        window_strides=(1, 1),
        padding=[(padding, padding), (padding, padding)],
        rhs_dilation=(dilation, dilation),
        dimension_numbers=('NCHW', 'OIHW', 'NCHW'))
    y = y + conv_b[None, :, None, None]
    mean = jnp.mean(y, axis=(0, 2, 3), keepdims=True)
    var = jnp.mean((y - mean) ** 2, axis=(0, 2, 3), keepdims=True)
    return ((y - mean) * jax.lax.rsqrt(var + eps)
            * gamma[None, :, None, None] + beta[None, :, None, None])


if __name__ == "__main__":
    # creat_bn_conv(input_size=4, filter_size=8, kernel_size=3, padding=2, dilation=2)
    C_in, C_out, K, padding, dilation = 4, 8, 3, 2, 2
    N, H, W = 2, 16, 16

    key = jax.random.PRNGKey(0)
    k_x, k_w, k_b = jax.random.split(key, 3)
    x = jax.random.normal(k_x, (N, C_in, H, W), dtype=jnp.float32)
    conv_w = 0.1 * jax.random.normal(k_w, (C_out, C_in, 1, K), dtype=jnp.float32)
    conv_b = 0.1 * jax.random.normal(k_b, (C_out,), dtype=jnp.float32)
    bn_gamma = jnp.ones((C_out,), dtype=jnp.float32)   # BatchNorm2d default init
    bn_beta = jnp.zeros((C_out,), dtype=jnp.float32)

    out = creat_bn_conv_forward(x, conv_w, conv_b, bn_gamma, bn_beta,
                                padding=padding, dilation=dilation)
    out = jax.block_until_ready(out)

    ref = _reference(x, conv_w, conv_b, bn_gamma, bn_beta,
                     padding=padding, dilation=dilation)
    assert out.shape == ref.shape, (out.shape, ref.shape)
    assert jnp.allclose(out, ref, rtol=1e-4, atol=1e-4), \
        float(jnp.max(jnp.abs(out - ref)))

    print("KERNEL_OK")
</pallas_src>

<mosaic_0001>
module attributes {stable_mosaic.version = 11 : i64} {
  func.func @_bn_conv_kernel(%arg0: i32, %arg1: memref<4x804xf32, #tpu.memory_space<vmem>>, %arg2: memref<8x12xf32, #tpu.memory_space<vmem>>, %arg3: memref<8x1xf32, #tpu.memory_space<vmem>>, %arg4: memref<8x1xf32, #tpu.memory_space<vmem>>, %arg5: memref<1x800xf32, #tpu.memory_space<vmem>>, %arg6: memref<8x800xf32, #tpu.memory_space<vmem>>) attributes {dimension_semantics = [#tpu.dimension_semantics<arbitrary>], iteration_bounds = array<i64: 1>, scalar_prefetch = 0 : i64, scratch_operands = 0 : i64, tpu.core_type = #tpu.core_type<tc>, window_params = [{pipeline_mode = #tpu.pipeline_mode<synchronous>, transform_indices = @transform_0, window_bounds = array<i64: 4, 804>}, {pipeline_mode = #tpu.pipeline_mode<synchronous>, transform_indices = @transform_1, window_bounds = array<i64: 8, 12>}, {pipeline_mode = #tpu.pipeline_mode<synchronous>, transform_indices = @transform_2, window_bounds = array<i64: 8, 1>}, {pipeline_mode = #tpu.pipeline_mode<synchronous>, transform_indices = @transform_3, window_bounds = array<i64: 8, 1>}, {pipeline_mode = #tpu.pipeline_mode<synchronous>, transform_indices = @transform_4, window_bounds = array<i64: 1, 800>}, {pipeline_mode = #tpu.pipeline_mode<synchronous>, transform_indices = @transform_5, window_bounds = array<i64: 8, 800>}]} {
    %cst = arith.constant 0.000000e+00 : f32
    %0 = vector.broadcast %cst : f32 to vector<8x800xf32>
    %c0 = arith.constant 0 : index
    %c0_0 = arith.constant 0 : index
    %1 = vector.load %arg2[%c0, %c0_0] : memref<8x12xf32, #tpu.memory_space<vmem>>, vector<8x4xf32>
    %c0_1 = arith.constant 0 : index
    %c0_2 = arith.constant 0 : index
    %2 = vector.load %arg1[%c0_1, %c0_2] : memref<4x804xf32, #tpu.memory_space<vmem>>, vector<4x800xf32>
    %cst_3 = arith.constant dense<0.000000e+00> : vector<8x800xf32>
    %3 = tpu.matmul %1, %2, %cst_3 {dimension_numbers = #tpu.dot_dimension_numbers<[1], [0], [0], [1], [0, 0, 1, 1], [], []>} : vector<8x4xf32>, vector<4x800xf32>, vector<8x800xf32> -> vector<8x800xf32>
    %4 = arith.addf %0, %3 : vector<8x800xf32>
    %c0_4 = arith.constant 0 : index
    %c4 = arith.constant 4 : index
    %5 = vector.load %arg2[%c0_4, %c4] : memref<8x12xf32, #tpu.memory_space<vmem>>, vector<8x4xf32>
    %c0_5 = arith.constant 0 : index
    %c2 = arith.constant 2 : index
    %6 = vector.load %arg1[%c0_5, %c2] : memref<4x804xf32, #tpu.memory_space<vmem>>, vector<4x800xf32>
    %cst_6 = arith.constant dense<0.000000e+00> : vector<8x800xf32>
    %7 = tpu.matmul %5, %6, %cst_6 {dimension_numbers = #tpu.dot_dimension_numbers<[1], [0], [0], [1], [0, 0, 1, 1], [], []>} : vector<8x4xf32>, vector<4x800xf32>, vector<8x800xf32> -> vector<8x800xf32>
    %8 = arith.addf %4, %7 : vector<8x800xf32>
    %c0_7 = arith.constant 0 : index
    %c8 = arith.constant 8 : index
    %9 = vector.load %arg2[%c0_7, %c8] : memref<8x12xf32, #tpu.memory_space<vmem>>, vector<8x4xf32>
    %c0_8 = arith.constant 0 : index
    %c4_9 = arith.constant 4 : index
    %10 = vector.load %arg1[%c0_8, %c4_9] : memref<4x804xf32, #tpu.memory_space<vmem>>, vector<4x800xf32>
    %cst_10 = arith.constant dense<0.000000e+00> : vector<8x800xf32>
    %11 = tpu.matmul %9, %10, %cst_10 {dimension_numbers = #tpu.dot_dimension_numbers<[1], [0], [0], [1], [0, 0, 1, 1], [], []>} : vector<8x4xf32>, vector<4x800xf32>, vector<8x800xf32> -> vector<8x800xf32>
    %12 = arith.addf %8, %11 : vector<8x800xf32>
    %c0_11 = arith.constant 0 : index
    %c0_12 = arith.constant 0 : index
    %13 = vector.load %arg5[%c0_11, %c0_12] : memref<1x800xf32, #tpu.memory_space<vmem>>, vector<1x800xf32>
    %14 = vector.broadcast %13 : vector<1x800xf32> to vector<8x800xf32>
    %15 = arith.mulf %12, %14 : vector<8x800xf32>
    %cst_13 = arith.constant dense<0.000000e+00> : vector<8xf32>
    %16 = vector.multi_reduction <add>, %15, %cst_13 [1] : vector<8x800xf32> to vector<8xf32>
    %17 = vector.shape_cast %16 : vector<8xf32> to vector<8x1xf32>
    %cst_14 = arith.constant 1.562500e-03 : f32
    %18 = vector.broadcast %cst_14 : f32 to vector<8x1xf32>
    %19 = arith.mulf %17, %18 : vector<8x1xf32>
    %20 = vector.broadcast %19 : vector<8x1xf32> to vector<8x800xf32>
    %21 = arith.subf %12, %20 : vector<8x800xf32>
    %22 = vector.broadcast %13 : vector<1x800xf32> to vector<8x800xf32>
    %23 = arith.mulf %21, %22 : vector<8x800xf32>
    %24 = arith.mulf %23, %23 : vector<8x800xf32>
    %cst_15 = arith.constant dense<0.000000e+00> : vector<8xf32>
    %25 = vector.multi_reduction <add>, %24, %cst_15 [1] : vector<8x800xf32> to vector<8xf32>
    %26 = vector.shape_cast %25 : vector<8xf32> to vector<8x1xf32>
    %cst_16 = arith.constant 1.562500e-03 : f32
    %27 = vector.broadcast %cst_16 : f32 to vector<8x1xf32>
    %28 = arith.mulf %26, %27 : vector<8x1xf32>
    %c0_17 = arith.constant 0 : index
    %c0_18 = arith.constant 0 : index
    %29 = vector.load %arg3[%c0_17, %c0_18] : memref<8x1xf32, #tpu.memory_space<vmem>>, vector<8x1xf32>
    %cst_19 = arith.constant 9.99999974E-6 : f32
    %30 = vector.broadcast %cst_19 : f32 to vector<8x1xf32>
    %31 = arith.addf %28, %30 : vector<8x1xf32>
    %32 = math.rsqrt %31 : vector<8x1xf32>
    %33 = arith.mulf %29, %32 : vector<8x1xf32>
    %c0_20 = arith.constant 0 : index
    %c0_21 = arith.constant 0 : index
    %34 = vector.load %arg4[%c0_20, %c0_21] : memref<8x1xf32, #tpu.memory_space<vmem>>, vector<8x1xf32>
    %35 = arith.mulf %19, %33 : vector<8x1xf32>
    %36 = arith.subf %34, %35 : vector<8x1xf32>
    %37 = vector.broadcast %33 : vector<8x1xf32> to vector<8x800xf32>
    %38 = arith.mulf %12, %37 : vector<8x800xf32>
    %39 = vector.broadcast %36 : vector<8x1xf32> to vector<8x800xf32>
    %40 = arith.addf %38, %39 : vector<8x800xf32>
    %c0_22 = arith.constant 0 : index
    %c0_23 = arith.constant 0 : index
    %41 = vector.load %arg6[%c0_22, %c0_23] : memref<8x800xf32, #tpu.memory_space<vmem>>, vector<8x800xf32>
    tpu.vector_store %arg6[%c0_22, %c0_23], %40 {strides = array<i32>} : memref<8x800xf32, #tpu.memory_space<vmem>>, vector<8x800xf32>,
    return
  }
  func.func @transform_0(%arg0: i32) -> (i32, i32) {
    %c0_i32 = arith.constant 0 : i32
    %c0_i32_0 = arith.constant 0 : i32
    %c0_i32_1 = arith.constant 0 : i32
    return %c0_i32, %c0_i32_0 : i32, i32
  }
  func.func @transform_1(%arg0: i32) -> (i32, i32) {
    %c0_i32 = arith.constant 0 : i32
    %c0_i32_0 = arith.constant 0 : i32
    %c0_i32_1 = arith.constant 0 : i32
    return %c0_i32, %c0_i32_0 : i32, i32
  }
  func.func @transform_2(%arg0: i32) -> (i32, i32) {
    %c0_i32 = arith.constant 0 : i32
    %c0_i32_0 = arith.constant 0 : i32
    %c0_i32_1 = arith.constant 0 : i32
    return %c0_i32, %c0_i32_0 : i32, i32
  }
  func.func @transform_3(%arg0: i32) -> (i32, i32) {
    %c0_i32 = arith.constant 0 : i32
    %c0_i32_0 = arith.constant 0 : i32
    %c0_i32_1 = arith.constant 0 : i32
    return %c0_i32, %c0_i32_0 : i32, i32
  }
  func.func @transform_4(%arg0: i32) -> (i32, i32) {
    %c0_i32 = arith.constant 0 : i32
    %c0_i32_0 = arith.constant 0 : i32
    %c0_i32_1 = arith.constant 0 : i32
    return %c0_i32, %c0_i32_0 : i32, i32
  }
  func.func @transform_5(%arg0: i32) -> (i32, i32) {
    %c0_i32 = arith.constant 0 : i32
    %c0_i32_0 = arith.constant 0 : i32
    %c0_i32_1 = arith.constant 0 : i32
    return %c0_i32, %c0_i32_0 : i32, i32
  }
}

</mosaic_0001>

<llo_original>
// kernel: tpu_custom_call.1
$region0: #{tpu_custom_call.1}
  #allocation0 [shape = 'u32[]', space=smem, size = 0x4, offset = 0x4, fixed_abs, tag = 'smem constant byte address 0x4 - core index']
  #allocation1 [shape = 'u32[72,128]{1,0:T(1,128)}', space=vmem, size = 0x9000, scoped, tag = 'internal scratch']
  %s0 = inlined_call_operand.hbm [shape: f32[4,804], index: 0, kind: input, shape index: {}]
  %s1 = inlined_call_operand.vmem [shape: f32[8,12], index: 1, kind: input, shape index: {}]
  %s2 = inlined_call_operand.vmem [shape: f32[8,1], index: 2, kind: input, shape index: {}]
  %s3 = inlined_call_operand.vmem [shape: f32[8,1], index: 3, kind: input, shape index: {}]
  %s4 = inlined_call_operand.vmem [shape: f32[1,800], index: 4, kind: input, shape index: {}]
  %s5 = inlined_call_operand.hbm [shape: f32[8,800], index: 5, kind: output, shape index: {}]
  %s6 = sld [smem:[#allocation0]]
  $region34: #{tpu_custom_call.1} parent=0
    _
  %s8 = ssub.s32 1, %s6
  %s9 = scalar_select 0, %s8, %s6
  $region1: #{tpu_custom_call.1} parent=0
    #allocation2 [shape = 'u8[14336]{0}', space=vmem, size = 0x3800, scoped, tag = 'input window, operand 0, single buffered']
    #allocation3 [shape = 's32[1]{0}', space=sflag, size = 0x4, scoped, tag = 'scoped memory for tpu_custom_call.1']
    #allocation4 [shape = 's32[1]{0}', space=sflag, size = 0x4, scoped, tag = 'scoped memory for tpu_custom_call.1']
    #allocation5 [shape = 'u8[28672]{0}', space=vmem, size = 0x7000, scoped, tag = 'output window, operand 0, single buffered']
    %10 = vsyncpa [#allocation3], 0
    %11 = vsyncpa [#allocation4], 0
    // Predicated region
    $region2: #{tpu_custom_call.1} parent=1 // pred_check
      _
    $region3: #{tpu_custom_call.1} parent=1 // pred_check_branch
      %13 = sbr.rel (0) target = $region5
    $region4: #{tpu_custom_call.1} parent=1 // pred_region
      %15 = vsyncadd [#allocation3], 0
      %s17 = sshll.u32 %s0, 4
      %s18 = int_to_ptr.hbm [resolvable:$true] %s17
      %s19 = sshll.u32 [#allocation2], 4
      %s20 = int_to_ptr.vmem [resolvable:$true] %s19
      %22 = dma.hbm_to_vmem [thread:$0]  %s18, 448, %s20, [#allocation3]
    $region5: #{tpu_custom_call.1} parent=1 // pred_fallthru
      _
    // Predicated region
    $region6: #{tpu_custom_call.1} parent=1 // pred_check
      _
    $region7: #{tpu_custom_call.1} parent=1 // pred_check_branch
      %24 = sbr.rel (0) target = $region9
    $region8: #{tpu_custom_call.1} parent=1 // pred_region
      _
    $region9: #{tpu_custom_call.1} parent=1 // pred_fallthru
      _
    // Predicated region
    $region10: #{tpu_custom_call.1} parent=1 // pred_check
      _
    $region11: #{tpu_custom_call.1} parent=1 // pred_check_branch
      %26 = sbr.rel (0) target = $region13
    $region12: #{tpu_custom_call.1} parent=1 // pred_region
      _
    $region13: #{tpu_custom_call.1} parent=1 // pred_fallthru
      _
    // Predicated region
    $region14: #{tpu_custom_call.1} parent=1 // pred_check
      _
    $region15: #{tpu_custom_call.1} parent=1 // pred_check_branch
      %28 = sbr.rel (0) target = $region17
    $region16: #{tpu_custom_call.1} parent=1 // pred_region
      _
    $region17: #{tpu_custom_call.1} parent=1 // pred_fallthru
      _
    // Predicated region
    $region18: #{tpu_custom_call.1} parent=1 // pred_check
      _
    $region19: #{tpu_custom_call.1} parent=1 // pred_check_branch
      %30 = sbr.rel (0) target = $region21
    $region20: #{tpu_custom_call.1} parent=1 // pred_region
      _
    $region21: #{tpu_custom_call.1} parent=1 // pred_fallthru
      _
    // Predicated region
    $region22: #{tpu_custom_call.1} parent=1 // pred_check
      _
    $region23: #{tpu_custom_call.1} parent=1 // pred_check_branch
      %32 = sbr.rel (0) target = $region25
    $region24: #{tpu_custom_call.1} parent=1 // pred_region
      %34 = dma.done [#allocation3], 448
    $region25: #{tpu_custom_call.1} parent=1 // pred_fallthru
      _
    %v35 = vld [vmem:[%s1] sm:$0xff]
    %v36 = vld [vmem:[#allocation2] sm:$0xff]
    %v37 = vld [vmem:[#allocation2 + $0x8] sm:$0xff]
    %v38 = vld [vmem:[#allocation2 + $0x10] sm:$0xff]
    %v39 = vld [vmem:[#allocation2 + $0x18] sm:$0xf]
    %41 = vrot.lane.b32.xlu0 %v35, 124
    %v42 = vpop.permute.xlu0 %41
    %47 = vst [vmem:[#allocation1] ss:$2 sm:$0xff] %v36
    %s48 = scalar_lea.vmem [#allocation1], 16
    %49 = vst [vmem:[%s48] ss:$2 sm:$0xff] %v37
    %s50 = scalar_lea.vmem [#allocation1], 32
    %51 = vst [vmem:[%s50] ss:$2 sm:$0xff] %v38
    %s52 = scalar_lea.vmem [#allocation1], 48
    %53 = vst [vmem:[%s52] ss:$2 sm:$0xff] %v39
    %v54 = vld.sshfl [vmem:[#allocation1] sm:$0xff pattern:$0x75316420]
    %v55 = vld.sshfl [vmem:[#allocation1 + $0x8] sm:$0xff pattern:$0x75316420]
    %v56 = vld.sshfl [vmem:[#allocation1 + $0x10] sm:$0xff pattern:$0x75316420]
    %v57 = vld.sshfl [vmem:[#allocation1 + $0x18] sm:$0xff pattern:$0x75316420]
    %v58 = vld.sshfl [vmem:[#allocation1 + $0x20] sm:$0xff pattern:$0x75316420]
    %v59 = vld.sshfl [vmem:[#allocation1 + $0x28] sm:$0xff pattern:$0x75316420]
    %v60 = vld.sshfl [vmem:[#allocation1 + $0x30] sm:$0xff pattern:$0x75316420]
    %61 = vrot.lane.b32.xlu0 %v54, 126
    %v62 = vpop.permute.xlu0 %61
    %63 = vrot.lane.b32.xlu0 %v55, 126
    %v64 = vpop.permute.xlu0 %63
    %65 = vrot.lane.b32.xlu0 %v56, 126
    %v66 = vpop.permute.xlu0 %65
    %67 = vrot.lane.b32.xlu0 %v57, 126
    %v68 = vpop.permute.xlu0 %67
    %69 = vrot.lane.b32.xlu0 %v58, 126
    %v70 = vpop.permute.xlu0 %69
    %71 = vrot.lane.b32.xlu0 %v59, 126
    %v72 = vpop.permute.xlu0 %71
    %73 = vrot.lane.b32.xlu0 %v60, 126
    %v74 = vpop.permute.xlu0 %73
    %vm75 = vcmask 1031168
    %v76 = vsel %vm75, %v62, %v64
    %v77 = vsel %vm75, %v64, %v66
    %v78 = vsel %vm75, %v66, %v68
    %v79 = vsel %vm75, %v68, %v70
    %v80 = vsel %vm75, %v70, %v72
    %v81 = vsel %vm75, %v72, %v74
    %vm82 = vcmask 31744
    %v83 = vsel %vm82, %v42, 0
    %vm85 = vcmask 1043456
    %v86 = vsel %vm85, %v76, 0
    %v88 = vsel %vm85, %v77, 0
    %v90 = vsel %vm85, %v78, 0
    %v92 = vsel %vm85, %v79, 0
    %v94 = vsel %vm85, %v80, 0
    %v96 = vsel %vm85, %v81, 0
    %v98 = vsel %vm85, %v74, 0
    %100 = vmatpush.msra.mxu0 0.0
    %101 = vmatpush.msra.mxu0 0.0
    %102 = vmatpush.msra.mxu0 0.0
    %103 = vmatpush.msra.mxu0 0.0
    %104 = vmatpush.msra.mxu0 0.0
    %105 = vmatpush.msra.mxu0 0.0
    %106 = vmatpush.msra.mxu0 0.0
    %107 = vmatpush.msra.mxu0 0.0
    %108 = vmatpush.msra.mxu0 0.0
    %109 = vmatpush.msra.mxu0 0.0
    %110 = vmatpush.msra.mxu0 0.0
    %111 = vmatpush.msra.mxu0 0.0
    %112 = vmatpush.msra.mxu0 0.0
    %113 = vmatpush.msra.mxu0 0.0
    %114 = vmatpush.msra.mxu0 0.0
    %115 = vmatpush.msra.mxu0 %v86
    %116 = vmatmul.f32.gmra.mxu0 %v83
    %v117 = vpop.f32.mrf.mxu0
    %v118 = vadd.f32 0.0, %v117
    %119 = vdwg.mxu0
    %120 = vmatpush.msra.mxu0 0.0
    %121 = vmatpush.msra.mxu0 0.0
    %122 = vmatpush.msra.mxu0 0.0
    %123 = vmatpush.msra.mxu0 0.0
    %124 = vmatpush.msra.mxu0 0.0
    %125 = vmatpush.msra.mxu0 0.0
    %126 = vmatpush.msra.mxu0 0.0
    %127 = vmatpush.msra.mxu0 0.0
    %128 = vmatpush.msra.mxu0 0.0
    %129 = vmatpush.msra.mxu0 0.0
    %130 = vmatpush.msra.mxu0 0.0
    %131 = vmatpush.msra.mxu0 0.0
    %132 = vmatpush.msra.mxu0 0.0
    %133 = vmatpush.msra.mxu0 0.0
    %134 = vmatpush.msra.mxu0 0.0
    %135 = vmatpush.msra.mxu0 %v88
    %136 = vmatmul.f32.gmra.mxu0 %v83
    %v137 = vpop.f32.mrf.mxu0
    %v138 = vadd.f32 0.0, %v137
    %139 = vdwg.mxu0
    %140 = vmatpush.msra.mxu0 0.0
    %141 = vmatpush.msra.mxu0 0.0
    %142 = vmatpush.msra.mxu0 0.0
    %143 = vmatpush.msra.mxu0 0.0
    %144 = vmatpush.msra.mxu0 0.0
    %145 = vmatpush.msra.mxu0 0.0
    %146 = vmatpush.msra.mxu0 0.0
    %147 = vmatpush.msra.mxu0 0.0
    %148 = vmatpush.msra.mxu0 0.0
    %149 = vmatpush.msra.mxu0 0.0
    %150 = vmatpush.msra.mxu0 0.0
    %151 = vmatpush.msra.mxu0 0.0
    %152 = vmatpush.msra.mxu0 0.0
    %153 = vmatpush.msra.mxu0 0.0
    %154 = vmatpush.msra.mxu0 0.0
    %155 = vmatpush.msra.mxu0 %v90
    %156 = vmatmul.f32.gmra.mxu0 %v83
    %v157 = vpop.f32.mrf.mxu0
    %v158 = vadd.f32 0.0, %v157
    %159 = vdwg.mxu0
    %160 = vmatpush.msra.mxu0 0.0
    %161 = vmatpush.msra.mxu0 0.0
    %162 = vmatpush.msra.mxu0 0.0
    %163 = vmatpush.msra.mxu0 0.0
    %164 = vmatpush.msra.mxu0 0.0
    %165 = vmatpush.msra.mxu0 0.0
    %166 = vmatpush.msra.mxu0 0.0
    %167 = vmatpush.msra.mxu0 0.0
    %168 = vmatpush.msra.mxu0 0.0
    %169 = vmatpush.msra.mxu0 0.0
    %170 = vmatpush.msra.mxu0 0.0
    %171 = vmatpush.msra.mxu0 0.0
    %172 = vmatpush.msra.mxu0 0.0
    %173 = vmatpush.msra.mxu0 0.0
    %174 = vmatpush.msra.mxu0 0.0
    %175 = vmatpush.msra.mxu0 %v92
    %176 = vmatmul.f32.gmra.mxu0 %v83
    %v177 = vpop.f32.mrf.mxu0
    %v178 = vadd.f32 0.0, %v177
    %179 = vdwg.mxu0
    %180 = vmatpush.msra.mxu0 0.0
    %181 = vmatpush.msra.mxu0 0.0
    %182 = vmatpush.msra.mxu0 0.0
    %183 = vmatpush.msra.mxu0 0.0
    %184 = vmatpush.msra.mxu0 0.0
    %185 = vmatpush.msra.mxu0 0.0
    %186 = vmatpush.msra.mxu0 0.0
    %187 = vmatpush.msra.mxu0 0.0
    %188 = vmatpush.msra.mxu0 0.0
    %189 = vmatpush.msra.mxu0 0.0
    %190 = vmatpush.msra.mxu0 0.0
    %191 = vmatpush.msra.mxu0 0.0
    %192 = vmatpush.msra.mxu0 0.0
    %193 = vmatpush.msra.mxu0 0.0
    %194 = vmatpush.msra.mxu0 0.0
    %195 = vmatpush.msra.mxu0 %v94
    %196 = vmatmul.f32.gmra.mxu0 %v83
    %v197 = vpop.f32.mrf.mxu0
    %v198 = vadd.f32 0.0, %v197
    %199 = vdwg.mxu0
    %200 = vmatpush.msra.mxu0 0.0
    %201 = vmatpush.msra.mxu0 0.0
    %202 = vmatpush.msra.mxu0 0.0
    %203 = vmatpush.msra.mxu0 0.0
    %204 = vmatpush.msra.mxu0 0.0
    %205 = vmatpush.msra.mxu0 0.0
    %206 = vmatpush.msra.mxu0 0.0
    %207 = vmatpush.msra.mxu0 0.0
    %208 = vmatpush.msra.mxu0 0.0
    %209 = vmatpush.msra.mxu0 0.0
    %210 = vmatpush.msra.mxu0 0.0
    %211 = vmatpush.msra.mxu0 0.0
    %212 = vmatpush.msra.mxu0 0.0
    %213 = vmatpush.msra.mxu0 0.0
    %214 = vmatpush.msra.mxu0 0.0
    %215 = vmatpush.msra.mxu0 %v96
    %216 = vmatmul.f32.gmra.mxu0 %v83
    %v217 = vpop.f32.mrf.mxu0
    %v218 = vadd.f32 0.0, %v217
    %219 = vdwg.mxu0
    %220 = vmatpush.msra.mxu0 0.0
    %221 = vmatpush.msra.mxu0 0.0
    %222 = vmatpush.msra.mxu0 0.0
    %223 = vmatpush.msra.mxu0 0.0
    %224 = vmatpush.msra.mxu0 0.0
    %225 = vmatpush.msra.mxu0 0.0
    %226 = vmatpush.msra.mxu0 0.0
    %227 = vmatpush.msra.mxu0 0.0
    %228 = vmatpush.msra.mxu0 0.0
    %229 = vmatpush.msra.mxu0 0.0
    %230 = vmatpush.msra.mxu0 0.0
    %231 = vmatpush.msra.mxu0 0.0
    %232 = vmatpush.msra.mxu0 0.0
    %233 = vmatpush.msra.mxu0 0.0
    %234 = vmatpush.msra.mxu0 0.0
    %235 = vmatpush.msra.mxu0 %v98
    %236 = vmatmul.f32.gmra.mxu0 %v83
    %v237 = vpop.f32.mrf.mxu0
    %v238 = vadd.f32 0.0, %v237
    %239 = vdwg.mxu0
    %240 = vst [vmem:[#allocation1] ss:$2 sm:$0xff] %v36
    %s241 = scalar_lea.vmem [#allocation1], 16
    %242 = vst [vmem:[%s241] ss:$2 sm:$0xff] %v37
    %s243 = scalar_lea.vmem [#allocation1], 32
    %244 = vst [vmem:[%s243] ss:$2 sm:$0xff] %v38
    %s245 = scalar_lea.vmem [#allocation1], 48
    %246 = vst [vmem:[%s245] ss:$2 sm:$0xff] %v39
    %v247 = vld.sshfl [vmem:[#allocation1] sm:$0xff pattern:$0x75316420]
    %v248 = vld.sshfl [vmem:[#allocation1 + $0x8] sm:$0xff pattern:$0x75316420]
    %v249 = vld.sshfl [vmem:[#allocation1 + $0x10] sm:$0xff pattern:$0x75316420]
    %v250 = vld.sshfl [vmem:[#allocation1 + $0x18] sm:$0xff pattern:$0x75316420]
    %v251 = vld.sshfl [vmem:[#allocation1 + $0x20] sm:$0xff pattern:$0x75316420]
    %v252 = vld.sshfl [vmem:[#allocation1 + $0x28] sm:$0xff pattern:$0x75316420]
    %v253 = vld.sshfl [vmem:[#allocation1 + $0x30] sm:$0xff pattern:$0x75316420]
    %v254 = vsel %vm82, %v35, 0
    %v256 = vsel %vm85, %v247, 0
    %v258 = vsel %vm85, %v248, 0
    %v260 = vsel %vm85, %v249, 0
    %v262 = vsel %vm85, %v250, 0
    %v264 = vsel %vm85, %v251, 0
    %v266 = vsel %vm85, %v252, 0
    %v268 = vsel %vm85, %v253, 0
    %270 = vmatpush.msra.mxu0 0.0
    %271 = vmatpush.msra.mxu0 0.0
    %272 = vmatpush.msra.mxu0 0.0
    %273 = vmatpush.msra.mxu0 0.0
    %274 = vmatpush.msra.mxu0 0.0
    %275 = vmatpush.msra.mxu0 0.0
    %276 = vmatpush.msra.mxu0 0.0
    %277 = vmatpush.msra.mxu0 0.0
    %278 = vmatpush.msra.mxu0 0.0
    %279 = vmatpush.msra.mxu0 0.0
    %280 = vmatpush.msra.mxu0 0.0
    %281 = vmatpush.msra.mxu0 0.0
    %282 = vmatpush.msra.mxu0 0.0
    %283 = vmatpush.msra.mxu0 0.0
    %284 = vmatpush.msra.mxu0 0.0
    %285 = vmatpush.msra.mxu0 %v256
    %286 = vmatmul.f32.gmra.mxu0 %v254
    %v287 = vpop.f32.mrf.mxu0
    %v288 = vadd.f32 %v118, %v287
    %289 = vdwg.mxu0
    %290 = vmatpush.msra.mxu0 0.0
    %291 = vmatpush.msra.mxu0 0.0
    %292 = vmatpush.msra.mxu0 0.0
    %293 = vmatpush.msra.mxu0 0.0
    %294 = vmatpush.msra.mxu0 0.0
    %295 = vmatpush.msra.mxu0 0.0
    %296 = vmatpush.msra.mxu0 0.0
    %297 = vmatpush.msra.mxu0 0.0
    %298 = vmatpush.msra.mxu0 0.0
    %299 = vmatpush.msra.mxu0 0.0
    %300 = vmatpush.msra.mxu0 0.0
    %301 = vmatpush.msra.mxu0 0.0
    %302 = vmatpush.msra.mxu0 0.0
    %303 = vmatpush.msra.mxu0 0.0
    %304 = vmatpush.msra.mxu0 0.0
    %305 = vmatpush.msra.mxu0 %v258
    %306 = vmatmul.f32.gmra.mxu0 %v254
    %v307 = vpop.f32.mrf.mxu0
    %v308 = vadd.f32 %v138, %v307
    %309 = vdwg.mxu0
    %310 = vmatpush.msra.mxu0 0.0
    %311 = vmatpush.msra.mxu0 0.0
    %312 = vmatpush.msra.mxu0 0.0
    %313 = vmatpush.msra.mxu0 0.0
    %314 = vmatpush.msra.mxu0 0.0
    %315 = vmatpush.msra.mxu0 0.0
    %316 = vmatpush.msra.mxu0 0.0
    %317 = vmatpush.msra.mxu0 0.0
    %318 = vmatpush.msra.mxu0 0.0
    %319 = vmatpush.msra.mxu0 0.0
    %320 = vmatpush.msra.mxu0 0.0
    %321 = vmatpush.msra.mxu0 0.0
    %322 = vmatpush.msra.mxu0 0.0
    %323 = vmatpush.msra.mxu0 0.0
    %324 = vmatpush.msra.mxu0 0.0
    %325 = vmatpush.msra.mxu0 %v260
    %326 = vmatmul.f32.gmra.mxu0 %v254
    %v327 = vpop.f32.mrf.mxu0
    %v328 = vadd.f32 %v158, %v327
    %329 = vdwg.mxu0
    %330 = vmatpush.msra.mxu0 0.0
    %331 = vmatpush.msra.mxu0 0.0
    %332 = vmatpush.msra.mxu0 0.0
    %333 = vmatpush.msra.mxu0 0.0
    %334 = vmatpush.msra.mxu0 0.0
    %335 = vmatpush.msra.mxu0 0.0
    %336 = vmatpush.msra.mxu0 0.0
    %337 = vmatpush.msra.mxu0 0.0
    %338 = vmatpush.msra.mxu0 0.0
    %339 = vmatpush.msra.mxu0 0.0
    %340 = vmatpush.msra.mxu0 0.0
    %341 = vmatpush.msra.mxu0 0.0
    %342 = vmatpush.msra.mxu0 0.0
    %343 = vmatpush.msra.mxu0 0.0
    %344 = vmatpush.msra.mxu0 0.0
    %345 = vmatpush.msra.mxu0 %v262
    %346 = vmatmul.f32.gmra.mxu0 %v254
    %v347 = vpop.f32.mrf.mxu0
    %v348 = vadd.f32 %v178, %v347
    %349 = vdwg.mxu0
    %350 = vmatpush.msra.mxu0 0.0
    %351 = vmatpush.msra.mxu0 0.0
    %352 = vmatpush.msra.mxu0 0.0
    %353 = vmatpush.msra.mxu0 0.0
    %354 = vmatpush.msra.mxu0 0.0
    %355 = vmatpush.msra.mxu0 0.0
    %356 = vmatpush.msra.mxu0 0.0
    %357 = vmatpush.msra.mxu0 0.0
    %358 = vmatpush.msra.mxu0 0.0
    %359 = vmatpush.msra.mxu0 0.0
    %360 = vmatpush.msra.mxu0 0.0
    %361 = vmatpush.msra.mxu0 0.0
    %362 = vmatpush.msra.mxu0 0.0
    %363 = vmatpush.msra.mxu0 0.0
    %364 = vmatpush.msra.mxu0 0.0
    %365 = vmatpush.msra.mxu0 %v264
    %366 = vmatmul.f32.gmra.mxu0 %v254
    %v367 = vpop.f32.mrf.mxu0
    %v368 = vadd.f32 %v198, %v367
    %369 = vdwg.mxu0
    %370 = vmatpush.msra.mxu0 0.0
    %371 = vmatpush.msra.mxu0 0.0
    %372 = vmatpush.msra.mxu0 0.0
    %373 = vmatpush.msra.mxu0 0.0
    %374 = vmatpush.msra.mxu0 0.0
    %375 = vmatpush.msra.mxu0 0.0
    %376 = vmatpush.msra.mxu0 0.0
    %377 = vmatpush.msra.mxu0 0.0
    %378 = vmatpush.msra.mxu0 0.0
    %379 = vmatpush.msra.mxu0 0.0
    %380 = vmatpush.msra.mxu0 0.0
    %381 = vmatpush.msra.mxu0 0.0
    %382 = vmatpush.msra.mxu0 0.0
    %383 = vmatpush.msra.mxu0 0.0
    %384 = vmatpush.msra.mxu0 0.0
    %385 = vmatpush.msra.mxu0 %v266
    %386 = vmatmul.f32.gmra.mxu0 %v254
    %v387 = vpop.f32.mrf.mxu0
    %v388 = vadd.f32 %v218, %v387
    %389 = vdwg.mxu0
    %390 = vmatpush.msra.mxu0 0.0
    %391 = vmatpush.msra.mxu0 0.0
    %392 = vmatpush.msra.mxu0 0.0
    %393 = vmatpush.msra.mxu0 0.0
    %394 = vmatpush.msra.mxu0 0.0
    %395 = vmatpush.msra.mxu0 0.0
    %396 = vmatpush.msra.mxu0 0.0
    %397 = vmatpush.msra.mxu0 0.0
    %398 = vmatpush.msra.mxu0 0.0
    %399 = vmatpush.msra.mxu0 0.0
    %400 = vmatpush.msra.mxu0 0.0
    %401 = vmatpush.msra.mxu0 0.0
    %402 = vmatpush.msra.mxu0 0.0
    %403 = vmatpush.msra.mxu0 0.0
    %404 = vmatpush.msra.mxu0 0.0
    %405 = vmatpush.msra.mxu0 %v268
    %406 = vmatmul.f32.gmra.mxu0 %v254
    %v407 = vpop.f32.mrf.mxu0
    %v408 = vadd.f32 %v238, %v407
    %409 = vdwg.mxu0
    %v410 = vld [vmem:[%s1] sm:$0xff]
    %v411 = vld [vmem:[#allocation2] sm:$0xff]
    %v412 = vld [vmem:[#allocation2 + $0x8] sm:$0xff]
    %v413 = vld [vmem:[#allocation2 + $0x10] sm:$0xff]
    %v414 = vld [vmem:[#allocation2 + $0x18] sm:$0xf]
    %416 = vrot.lane.b32.xlu0 %v410, 120
    %v417 = vpop.permute.xlu0 %416
    %422 = vst [vmem:[#allocation1] ss:$2 sm:$0xff] %v411
    %s423 = scalar_lea.vmem [#allocation1], 16
    %424 = vst [vmem:[%s423] ss:$2 sm:$0xff] %v412
    %s425 = scalar_lea.vmem [#allocation1], 32
    %426 = vst [vmem:[%s425] ss:$2 sm:$0xff] %v413
    %s427 = scalar_lea.vmem [#allocation1], 48
    %428 = vst [vmem:[%s427] ss:$2 sm:$0xff] %v414
    %v429 = vld.sshfl [vmem:[#allocation1] sm:$0xff pattern:$0x75316420]
    %v430 = vld.sshfl [vmem:[#allocation1 + $0x8] sm:$0xff pattern:$0x75316420]
    %v431 = vld.sshfl [vmem:[#allocation1 + $0x10] sm:$0xff pattern:$0x75316420]
    %v432 = vld.sshfl [vmem:[#allocation1 + $0x18] sm:$0xff pattern:$0x75316420]
    %v433 = vld.sshfl [vmem:[#allocation1 + $0x20] sm:$0xff pattern:$0x75316420]
    %v434 = vld.sshfl [vmem:[#allocation1 + $0x28] sm:$0xff pattern:$0x75316420]
    %v435 = vld.sshfl [vmem:[#allocation1 + $0x30] sm:$0xff pattern:$0x75316420]
    %436 = vrot.lane.b32.xlu0 %v429, 124
    %v437 = vpop.permute.xlu0 %436
    %438 = vrot.lane.b32.xlu0 %v430, 124
    %v439 = vpop.permute.xlu0 %438
    %440 = vrot.lane.b32.xlu0 %v431, 124
    %v441 = vpop.permute.xlu0 %440
    %442 = vrot.lane.b32.xlu0 %v432, 124
    %v443 = vpop.permute.xlu0 %442
    %444 = vrot.lane.b32.xlu0 %v433, 124
    %v445 = vpop.permute.xlu0 %444
    %446 = vrot.lane.b32.xlu0 %v434, 124
    %v447 = vpop.permute.xlu0 %446
    %448 = vrot.lane.b32.xlu0 %v435, 124
    %v449 = vpop.permute.xlu0 %448
    %vm450 = vcmask 1014784
    %v451 = vsel %vm450, %v437, %v439
    %v452 = vsel %vm450, %v439, %v441
    %v453 = vsel %vm450, %v441, %v443
    %v454 = vsel %vm450, %v443, %v445
    %v455 = vsel %vm450, %v445, %v447
    %v456 = vsel %vm450, %v447, %v449
    %v457 = vsel %vm82, %v417, 0
    %v459 = vsel %vm85, %v451, 0
    %v461 = vsel %vm85, %v452, 0
    %v463 = vsel %vm85, %v453, 0
    %v465 = vsel %vm85, %v454, 0
    %v467 = vsel %vm85, %v455, 0
    %v469 = vsel %vm85, %v456, 0
    %v471 = vsel %vm85, %v449, 0
    %473 = vmatpush.msra.mxu0 0.0
    %474 = vmatpush.msra.mxu0 0.0
    %475 = vmatpush.msra.mxu0 0.0
    %476 = vmatpush.msra.mxu0 0.0
    %477 = vmatpush.msra.mxu0 0.0
    %478 = vmatpush.msra.mxu0 0.0
    %479 = vmatpush.msra.mxu0 0.0
    %480 = vmatpush.msra.mxu0 0.0
    %481 = vmatpush.msra.mxu0 0.0
    %482 = vmatpush.msra.mxu0 0.0
    %483 = vmatpush.msra.mxu0 0.0
    %484 = vmatpush.msra.mxu0 0.0
    %485 = vmatpush.msra.mxu0 0.0
    %486 = vmatpush.msra.mxu0 0.0
    %487 = vmatpush.msra.mxu0 0.0
    %488 = vmatpush.msra.mxu0 %v459
    %489 = vmatmul.f32.gmra.mxu0 %v457
    %v490 = vpop.f32.mrf.mxu0
    %v491 = vadd.f32 0.0, %v490
    %492 = vdwg.mxu0
    %493 = vmatpush.msra.mxu0 0.0
    %494 = vmatpush.msra.mxu0 0.0
    %495 = vmatpush.msra.mxu0 0.0
    %496 = vmatpush.msra.mxu0 0.0
    %497 = vmatpush.msra.mxu0 0.0
    %498 = vmatpush.msra.mxu0 0.0
    %499 = vmatpush.msra.mxu0 0.0
    %500 = vmatpush.msra.mxu0 0.0
    %501 = vmatpush.msra.mxu0 0.0
    %502 = vmatpush.msra.mxu0 0.0
    %503 = vmatpush.msra.mxu0 0.0
    %504 = vmatpush.msra.mxu0 0.0
    %505 = vmatpush.msra.mxu0 0.0
    %506 = vmatpush.msra.mxu0 0.0
    %507 = vmatpush.msra.mxu0 0.0
    %508 = vmatpush.msra.mxu0 %v461
    %509 = vmatmul.f32.gmra.mxu0 %v457
    %v510 = vpop.f32.mrf.mxu0
    %v511 = vadd.f32 0.0, %v510
    %512 = vdwg.mxu0
    %513 = vmatpush.msra.mxu0 0.0
    %514 = vmatpush.msra.mxu0 0.0
    %515 = vmatpush.msra.mxu0 0.0
    %516 = vmatpush.msra.mxu0 0.0
    %517 = vmatpush.msra.mxu0 0.0
    %518 = vmatpush.msra.mxu0 0.0
    %519 = vmatpush.msra.mxu0 0.0
    %520 = vmatpush.msra.mxu0 0.0
    %521 = vmatpush.msra.mxu0 0.0
    %522 = vmatpush.msra.mxu0 0.0
    %523 = vmatpush.msra.mxu0 0.0
    %524 = vmatpush.msra.mxu0 0.0
    %525 = vmatpush.msra.mxu0 0.0
    %526 = vmatpush.msra.mxu0 0.0
    %527 = vmatpush.msra.mxu0 0.0
    %528 = vmatpush.msra.mxu0 %v463
    %529 = vmatmul.f32.gmra.mxu0 %v457
    %v530 = vpop.f32.mrf.mxu0
    %v531 = vadd.f32 0.0, %v530
    %532 = vdwg.mxu0
    %533 = vmatpush.msra.mxu0 0.0
    %534 = vmatpush.msra.mxu0 0.0
    %535 = vmatpush.msra.mxu0 0.0
    %536 = vmatpush.msra.mxu0 0.0
    %537 = vmatpush.msra.mxu0 0.0
    %538 = vmatpush.msra.mxu0 0.0
    %539 = vmatpush.msra.mxu0 0.0
    %540 = vmatpush.msra.mxu0 0.0
    %541 = vmatpush.msra.mxu0 0.0
    %542 = vmatpush.msra.mxu0 0.0
    %543 = vmatpush.msra.mxu0 0.0
    %544 = vmatpush.msra.mxu0 0.0
    %545 = vmatpush.msra.mxu0 0.0
    %546 = vmatpush.msra.mxu0 0.0
    %547 = vmatpush.msra.mxu0 0.0
    %548 = vmatpush.msra.mxu0 %v465
    %549 = vmatmul.f32.gmra.mxu0 %v457
    %v550 = vpop.f32.mrf.mxu0
    %v551 = vadd.f32 0.0, %v550
    %552 = vdwg.mxu0
    %553 = vmatpush.msra.mxu0 0.0
    %554 = vmatpush.msra.mxu0 0.0
    %555 = vmatpush.msra.mxu0 0.0
    %556 = vmatpush.msra.mxu0 0.0
    %557 = vmatpush.msra.mxu0 0.0
    %558 = vmatpush.msra.mxu0 0.0
    %559 = vmatpush.msra.mxu0 0.0
    %560 = vmatpush.msra.mxu0 0.0
    %561 = vmatpush.msra.mxu0 0.0
    %562 = vmatpush.msra.mxu0 0.0
    %563 = vmatpush.msra.mxu0 0.0
    %564 = vmatpush.msra.mxu0 0.0
    %565 = vmatpush.msra.mxu0 0.0
    %566 = vmatpush.msra.mxu0 0.0
    %567 = vmatpush.msra.mxu0 0.0
    %568 = vmatpush.msra.mxu0 %v467
    %569 = vmatmul.f32.gmra.mxu0 %v457
    %v570 = vpop.f32.mrf.mxu0
    %v571 = vadd.f32 0.0, %v570
    %572 = vdwg.mxu0
    %573 = vmatpush.msra.mxu0 0.0
    %574 = vmatpush.msra.mxu0 0.0
    %575 = vmatpush.msra.mxu0 0.0
    %576 = vmatpush.msra.mxu0 0.0
    %577 = vmatpush.msra.mxu0 0.0
    %578 = vmatpush.msra.mxu0 0.0
    %579 = vmatpush.msra.mxu0 0.0
    %580 = vmatpush.msra.mxu0 0.0
    %581 = vmatpush.msra.mxu0 0.0
    %582 = vmatpush.msra.mxu0 0.0
    %583 = vmatpush.msra.mxu0 0.0
    %584 = vmatpush.msra.mxu0 0.0
    %585 = vmatpush.msra.mxu0 0.0
    %586 = vmatpush.msra.mxu0 0.0
    %587 = vmatpush.msra.mxu0 0.0
    %588 = vmatpush.msra.mxu0 %v469
    %589 = vmatmul.f32.gmra.mxu0 %v457
    %v590 = vpop.f32.mrf.mxu0
    %v591 = vadd.f32 0.0, %v590
    %592 = vdwg.mxu0
    %593 = vmatpush.msra.mxu0 0.0
    %594 = vmatpush.msra.mxu0 0.0
    %595 = vmatpush.msra.mxu0 0.0
    %596 = vmatpush.msra.mxu0 0.0
    %597 = vmatpush.msra.mxu0 0.0
    %598 = vmatpush.msra.mxu0 0.0
    %599 = vmatpush.msra.mxu0 0.0
    %600 = vmatpush.msra.mxu0 0.0
    %601 = vmatpush.msra.mxu0 0.0
    %602 = vmatpush.msra.mxu0 0.0
    %603 = vmatpush.msra.mxu0 0.0
    %604 = vmatpush.msra.mxu0 0.0
    %605 = vmatpush.msra.mxu0 0.0
    %606 = vmatpush.msra.mxu0 0.0
    %607 = vmatpush.msra.mxu0 0.0
    %608 = vmatpush.msra.mxu0 %v471
    %609 = vmatmul.f32.gmra.mxu0 %v457
    %v610 = vpop.f32.mrf.mxu0
    %v611 = vadd.f32 0.0, %v610
    %612 = vdwg.mxu0
    %v613 = vadd.f32 %v288, %v491
    %v614 = vadd.f32 %v308, %v511
    %v615 = vadd.f32 %v328, %v531
    %v616 = vadd.f32 %v348, %v551
    %v617 = vadd.f32 %v368, %v571
    %v618 = vadd.f32 %v388, %v591
    %v619 = vadd.f32 %v408, %v611
    %v620 = vld [vmem:[%s4] sm:$0x7f]
    %v622 = vperm.slane %v620, 0
    %v623 = vperm.slane %v620, 1
    %v624 = vperm.slane %v620, 2
    %v625 = vperm.slane %v620, 3
    %v626 = vperm.slane %v620, 4
    %v627 = vperm.slane %v620, 5
    %v628 = vperm.slane %v620, 6
    %v636 = vmul.f32 %v613, %v622
    %v637 = vmul.f32 %v614, %v623
    %v638 = vmul.f32 %v615, %v624
    %v639 = vmul.f32 %v616, %v625
    %v640 = vmul.f32 %v617, %v626
    %v641 = vmul.f32 %v618, %v627
    %v642 = vmul.f32 %v619, %v628
    %v643 = vadd.f32 %v636, %v637
    %v644 = vadd.f32 %v643, %v638
    %v645 = vadd.f32 %v644, %v639
    %v646 = vadd.f32 %v645, %v640
    %v647 = vadd.f32 %v646, %v641
    %vm648 = vcmask 261120
    %v649 = vsel %vm648, %v642, 0.0
    %v650 = vadd.f32 %v647, %v649
    %651 = vadd.xlane.f32.xlu0 %v650
    %v652 = vpop.xlane.xlu0 %651
    %v653 = vmul.f32 %v652, 0.0015625
    %v654 = vsub.f32 %v613, %v653
    %v655 = vsub.f32 %v614, %v653
    %v656 = vsub.f32 %v615, %v653
    %v657 = vsub.f32 %v616, %v653
    %v658 = vsub.f32 %v617, %v653
    %v659 = vsub.f32 %v618, %v653
    %v660 = vsub.f32 %v619, %v653
    %v661 = vmul.f32 %v654, %v622
    %v662 = vmul.f32 %v655, %v623
    %v663 = vmul.f32 %v656, %v624
    %v664 = vmul.f32 %v657, %v625
    %v665 = vmul.f32 %v658, %v626
    %v666 = vmul.f32 %v659, %v627
    %v667 = vmul.f32 %v660, %v628
    %v668 = vmul.f32 %v661, %v661
    %v669 = vmul.f32 %v662, %v662
    %v670 = vmul.f32 %v663, %v663
    %v671 = vmul.f32 %v664, %v664
    %v672 = vmul.f32 %v665, %v665
    %v673 = vmul.f32 %v666, %v666
    %v674 = vmul.f32 %v667, %v667
    %v675 = vadd.f32 %v668, %v669
    %v676 = vadd.f32 %v675, %v670
    %v677 = vadd.f32 %v676, %v671
    %v678 = vadd.f32 %v677, %v672
    %v679 = vadd.f32 %v678, %v673
    %v680 = vsel %vm648, %v674, 0.0
    %v681 = vadd.f32 %v679, %v680
    %682 = vadd.xlane.f32.xlu0 %v681
    %v683 = vpop.xlane.xlu0 %682
    %v684 = vmul.f32 %v683, 0.0015625
    %v685 = vld [vmem:[%s2] sm:$0xff]
    %v686 = vadd.f32 %v684, 1e-05
    %v687 = vrsqrt.pop %v686
    %v688 = vmul.f32 %v687, %v686
    %v689 = vmul.f32 %v688, %v687
    %v690 = vmul.f32 0.5, %v689
    %v691 = vsub.f32 1.5, %v690
    %v692 = vmul.f32 %v687, %v691
    %vm693 = vweird.f32 %v686
    %vm694 = vweird.f32 %v687
    %vm695 = vmor %vm693, %vm694
    %v696 = vsel %vm695, %v687, %v692
    %v697 = vmul.f32 %v685, %v696
    %v698 = vld [vmem:[%s3] sm:$0xff]
    %v699 = vmul.f32 %v653, %v697
    %v700 = vsub.f32 %v698, %v699
    %702 = vset.pattern.permute.xlu0 0
    %703 = vperm.xlu0 %702, %v697
    %v704 = vpop.permute.xlu0 %703
    %v706 = vmul.f32 %v613, %v704
    %v707 = vmul.f32 %v614, %v704
    %v708 = vmul.f32 %v615, %v704
    %v709 = vmul.f32 %v616, %v704
    %v710 = vmul.f32 %v617, %v704
    %v711 = vmul.f32 %v618, %v704
    %v712 = vmul.f32 %v619, %v704
    %714 = vset.pattern.permute.xlu0 0
    %715 = vperm.xlu0 %714, %v700
    %v716 = vpop.permute.xlu0 %715
    %v718 = vadd.f32 %v706, %v716
    %v719 = vadd.f32 %v707, %v716
    %v720 = vadd.f32 %v708, %v716
    %v721 = vadd.f32 %v709, %v716
    %v722 = vadd.f32 %v710, %v716
    %v723 = vadd.f32 %v711, %v716
    %v724 = vadd.f32 %v712, %v716
    %725 = vst [vmem:[#allocation5] sm:$0xff] %v718
    %726 = vst [vmem:[#allocation5 + $0x8] sm:$0xff] %v719
    %727 = vst [vmem:[#allocation5 + $0x10] sm:$0xff] %v720
    %728 = vst [vmem:[#allocation5 + $0x18] sm:$0xff] %v721
    %729 = vst [vmem:[#allocation5 + $0x20] sm:$0xff] %v722
    %730 = vst [vmem:[#allocation5 + $0x28] sm:$0xff] %v723
    %731 = vst.msk [vmem:[#allocation5 + $0x30] sm:$0xff] %vm648, %v724
    // Predicated region
    $region26: #{tpu_custom_call.1} parent=1 // pred_check
      _
    $region27: #{tpu_custom_call.1} parent=1 // pred_check_branch
      %733 = sbr.rel (0) target = $region29
    $region28: #{tpu_custom_call.1} parent=1 // pred_region
      %735 = vsyncadd [#allocation4], 0
      %s737 = sshll.u32 [#allocation5], 4
      %s738 = int_to_ptr.vmem [resolvable:$true] %s737
      %s739 = sshll.u32 %s5, 4
      %s740 = int_to_ptr.hbm [resolvable:$true] %s739
      %742 = dma.vmem_to_hbm [thread:$0]  %s738, 896, %s740, [#allocation4]
    $region29: #{tpu_custom_call.1} parent=1 // pred_fallthru
      _
    // Predicated region
    $region30: #{tpu_custom_call.1} parent=1 // pred_check
      _
    $region31: #{tpu_custom_call.1} parent=1 // pred_check_branch
      %744 = sbr.rel (0) target = $region33
    $region32: #{tpu_custom_call.1} parent=1 // pred_region
      %746 = dma.done [#allocation4], 896
    $region33: #{tpu_custom_call.1} parent=1 // pred_fallthru
      _
    %747 = vsyncpa [#allocation3], 1
    %748 = vsyncpa [#allocation4], 1

</llo_original>
